<compile_context>
chip_gen: v7x
topology: tpu7x:2x2x1
jax: 0.10.0
libtpu: 0.0.40
codegen_flags: <defaults>
</compile_context>

<pallas_src>
import functools

import jax
import jax.numpy as jnp
from jax.experimental import pallas as pl
from jax.experimental.pallas import tpu as pltpu


def _round_up(x, m):
    return (x + m - 1) // m * m


def _tiling(batch, block_batch):
    """Pick (num_tiles, tile_cols, padded_batch) with minimal padding.

    Pads only to a multiple of 128 lanes (<= 127 + 128*num_tiles dead rows),
    never up to a full tile, so B % block_batch != 0 costs at most a few
    hundred padded columns instead of an extra grid step.
    """
    bp = _round_up(max(batch, 1), 128)
    bb = _round_up(max(block_batch, 128), 128)
    n_tiles = -(-bp // bb)
    tb = _round_up(-(-bp // n_tiles), 128)
    return n_tiles, tb, n_tiles * tb


# ------------------------------------------------------------------ kernel ---
def fcqv_kernel(sT_ref, uT_ref, w1_ref, b1_ref, w2a_ref, w2b_ref, b2_ref,
                w3p_ref, b3_ref, out_ref):
    cdt = w1_ref.dtype  # compute dtype of the streamed operands (f32 or bf16)

    # Layer 1: h1^T = relu(W1 @ state^T + b1)              (h0, TB), lane-dense
    h1 = jnp.dot(w1_ref[...], sT_ref[...], preferred_element_type=jnp.float32)
    h1 = jnp.maximum(h1 + b1_ref[...], 0.0)                # f32 bias/relu

    # Layer 2: h2^T = relu(W2a @ h1^T + W2b @ action^T + b2)
    #   (== relu(W2 @ concat(h1, action)^T + b2), concat folded into split W2)
    z = jnp.dot(w2a_ref[...], h1.astype(cdt), preferred_element_type=jnp.float32)
    z = z + jnp.dot(w2b_ref[...], uT_ref[...], preferred_element_type=jnp.float32)
    h2 = jnp.maximum(z + b2_ref[...], 0.0)

    # Output layer on the MXU (large slack at these shapes).  W3 is zero-padded
    # to 8 rows so this is a plain (8, h1) x (h1, TB) dot; only row 0 is real.
    q = jnp.dot(w3p_ref[...], h2, preferred_element_type=jnp.float32)
    out_ref[...] = (q[0:1, :] + b3_ref[...]).astype(out_ref.dtype)  # (1, TB) lane-dense


# ------------------------------------------------------------- pallas call ---
def _fcqv_feature_major(sT, uT, params, block_batch):
    """sT: (input_dim, B), uT: (output_dim, B).  Returns q^T of shape (1, Bp)."""
    w1t, b1, w2at, w2bt, b2, w3, b3 = params
    input_dim, batch = sT.shape
    output_dim = uT.shape[0]
    h0 = w1t.shape[0]
    h1d = w2at.shape[0]

    n_tiles, tb, bp = _tiling(batch, block_batch)
    pad = bp - batch
    cdt = sT.dtype
    if pad:
        sT = jnp.pad(sT, ((0, 0), (0, pad)))
        uT = jnp.pad(uT, ((0, 0), (0, pad)))
    uT = uT.astype(cdt)

    # MXU weights in the compute dtype (tiny one-time casts; weights ~7 KiB).
    w1c, w2ac, w2bc = (w.astype(cdt) for w in (w1t, w2at, w2bt))
    # Biases and the output weight stay f32 (VPU math in f32 — matters on v5e).
    b1f, b2f, b3f = (b.astype(jnp.float32) for b in (b1, b2, b3))
    w3p = jnp.zeros((8, h1d), jnp.float32).at[0:1, :].set(w3.astype(jnp.float32))

    const = lambda i: (0, 0)  # weights/biases: same block every step (VMEM-resident)

    return pl.pallas_call(
        fcqv_kernel,
        out_shape=jax.ShapeDtypeStruct((1, bp), jnp.float32),
        grid=(n_tiles,),
        in_specs=[
            pl.BlockSpec((input_dim, tb), lambda i: (0, i)),    # state^T  (streamed)
            pl.BlockSpec((output_dim, tb), lambda i: (0, i)),   # action^T (streamed)
            pl.BlockSpec((h0, input_dim), const),               # W1  (torch layout)
            pl.BlockSpec((h0, 1), const),                       # b1
            pl.BlockSpec((h1d, h0), const),                     # W2[:, :h0]
            pl.BlockSpec((h1d, output_dim), const),             # W2[:, h0:]
            pl.BlockSpec((h1d, 1), const),                      # b2
            pl.BlockSpec((8, h1d), const),                      # W3 (padded to 8 rows)
            pl.BlockSpec((1, 1), const),                        # b3
        ],
        out_specs=pl.BlockSpec((1, tb), lambda i: (0, i)),      # lane-dense q^T
        # Megacore hint: shards batch tiles across TensorCores where supported
        # (v7x has 2 TCs; no-op on v5e/v6e).  If profiling on v7x shows a
        # single-core run, switch to (pltpu.CORE_PARALLEL,) and keep >=8 steps.
        compiler_params=pltpu.CompilerParams(
            dimension_semantics=("parallel",)),
    )(sT, uT, w1c, b1f, w2ac, w2bc, b2f, w3p, b3f)


# ----------------------------------------------------------------- wrappers ---
@functools.partial(jax.jit, static_argnames=("block_batch",))
def fcqv_forward(state, action, params, *, block_batch=16384):
    """FCQV forward, batch-major inputs (state: (B, in_dim), action: (B, out_dim)).

    Does one fused pad+transpose pass to feature-major before the kernel;
    callers that can supply feature-major data should use `fcqv_forward_t`.

    block_batch: batch rows per grid step.  At ~0.55 KiB VMEM per row (double-
    buffered streams + f32 intermediates), 16384 rows ~= 9 MiB, safely under
    the scoped-VMEM defaults of v5e (16 MiB), v6e/v7x (32 MiB).  Raise to
    ~32768 on v6e/v7x if profiling shows per-step overhead; keep enough grid
    steps (>=8) on v7x for 2-TensorCore balance.

    Compute dtype follows the input dtype (pass bf16 inputs for the bf16 MXU
    path); dots accumulate in f32 and bias/relu math stays f32.
    """
    batch = state.shape[0]
    if batch == 0:
        return jnp.zeros((0, 1), jnp.float32)
    out = _fcqv_feature_major(state.T, action.T, params, block_batch)
    return out[0, :batch].reshape(batch, 1)


@functools.partial(jax.jit, static_argnames=("block_batch",))
def fcqv_forward_t(state_t, action_t, params, *, block_batch=16384):
    """FCQV forward, feature-major inputs (state_t: (in_dim, B), action_t: (out_dim, B)).

    Avoids the wrapper-side transpose HBM pass entirely.
    """
    batch = state_t.shape[1]
    if batch == 0:
        return jnp.zeros((0, 1), jnp.float32)
    out = _fcqv_feature_major(state_t, action_t, params, block_batch)
    return out[0, :batch].reshape(batch, 1)


# ------------------------------------------------------- parameter helpers ---
def orthogonal_init(key, rows, cols, gain):
    """Mimic torch.nn.init.orthogonal_ for a (rows, cols) weight matrix."""
    n, m = (rows, cols) if rows >= cols else (cols, rows)
    a = jax.random.normal(key, (n, m), dtype=jnp.float32)
    q, r = jnp.linalg.qr(a)
    d = jnp.diagonal(r)
    q = q * jnp.where(d == 0, 1.0, jnp.sign(d))
    if rows < cols:
        q = q.T
    return gain * q[:rows, :cols]


def make_params(key, input_dim, output_dim, hidden_dims=(32, 32)):
    """FCQV params in PyTorch (out_features, in_features) weight layout.

    The layer-2 weight is split column-wise into the h1 part and the action
    part (exactly reproduces the concat).  Biases are zero columns (layer_init).
    """
    gain = jnp.sqrt(2.0)  # nn.init.calculate_gain('relu')
    k1, k2, k3 = jax.random.split(key, 3)
    h0, h1 = hidden_dims

    w1t = orthogonal_init(k1, h0, input_dim, gain)              # (h0, input_dim)
    b1 = jnp.zeros((h0, 1), jnp.float32)

    w2 = orthogonal_init(k2, h1, h0 + output_dim, gain)         # (h1, h0+out_dim)
    w2at = w2[:, :h0]
    w2bt = w2[:, h0:]
    b2 = jnp.zeros((h1, 1), jnp.float32)

    w3 = orthogonal_init(k3, 1, h1, gain)                       # (1, h1)
    b3 = jnp.zeros((1, 1), jnp.float32)

    return (w1t, b1, w2at, w2bt, b2, w3, b3)


# --------------------------------------------------------------- reference ---
def fcqv_reference(state, action, params):
    w1t, b1, w2at, w2bt, b2, w3, b3 = params
    h1 = jnp.maximum(state @ w1t.T + b1.T, 0.0)
    h2 = jnp.maximum(h1 @ w2at.T + action @ w2bt.T + b2.T, 0.0)
    return h2 @ w3.T + b3.T


# -------------------------------------------------------------------- main ---
if __name__ == "__main__":
    key = jax.random.PRNGKey(0)
    k_s, k_a, k_p = jax.random.split(key, 3)

    B, input_dim, output_dim = 8, 16, 4
    hidden_dims = (32, 32)

    state = jax.random.normal(k_s, (B, input_dim), dtype=jnp.float32)
    action = jax.random.normal(k_a, (B, output_dim), dtype=jnp.float32)
    params = make_params(k_p, input_dim, output_dim, hidden_dims)

    q_ref = fcqv_reference(state, action, params)

    # f32, batch-major entry
    q = jax.block_until_ready(fcqv_forward(state, action, params))
    assert q.shape == (B, 1)
    assert jnp.allclose(q, q_ref, atol=1e-4, rtol=1e-4)

    # feature-major entry (no wrapper transpose pass)
    q_t = jax.block_until_ready(fcqv_forward_t(state.T, action.T, params))
    assert q_t.shape == (B, 1)
    assert jnp.allclose(q_t, q_ref, atol=1e-4, rtol=1e-4)

    # batch not a multiple of 128 -> exercises the (minimal) padding path
    B2 = 13
    k_s2, k_a2 = jax.random.split(jax.random.PRNGKey(1))
    state2 = jax.random.normal(k_s2, (B2, input_dim), dtype=jnp.float32)
    action2 = jax.random.normal(k_a2, (B2, output_dim), dtype=jnp.float32)
    q2 = jax.block_until_ready(fcqv_forward(state2, action2, params))
    assert q2.shape == (B2, 1)
    assert jnp.allclose(q2, fcqv_reference(state2, action2, params),
                        atol=1e-4, rtol=1e-4)

    # multi-tile grid (3 steps) with a small block_batch to exercise streaming
    B3 = 300
    k_s3, k_a3 = jax.random.split(jax.random.PRNGKey(2))
    state3 = jax.random.normal(k_s3, (B3, input_dim), dtype=jnp.float32)
    action3 = jax.random.normal(k_a3, (B3, output_dim), dtype=jnp.float32)
    q3 = jax.block_until_ready(
        fcqv_forward(state3, action3, params, block_batch=128))
    assert q3.shape == (B3, 1)
    assert jnp.allclose(q3, fcqv_reference(state3, action3, params),
                        atol=1e-4, rtol=1e-4)

    # bf16 streamed inputs (compute dtype follows input dtype; f32 accumulation)
    q_bf16 = jax.block_until_ready(
        fcqv_forward(state.astype(jnp.bfloat16), action.astype(jnp.bfloat16),
                     params))
    assert q_bf16.shape == (B, 1)
    assert jnp.allclose(q_bf16, q_ref, atol=0.15, rtol=0.15)

    print("KERNEL_OK")
</pallas_src>

<mosaic_0001>
module attributes {stable_mosaic.version = 11 : i64} {
  func.func @fcqv_kernel(%arg0: i32, %arg1: memref<16x128xf32, #tpu.memory_space<vmem>>, %arg2: memref<4x128xf32, #tpu.memory_space<vmem>>, %arg3: memref<32x16xf32, #tpu.memory_space<vmem>>, %arg4: memref<32x1xf32, #tpu.memory_space<vmem>>, %arg5: memref<32x32xf32, #tpu.memory_space<vmem>>, %arg6: memref<32x4xf32, #tpu.memory_space<vmem>>, %arg7: memref<32x1xf32, #tpu.memory_space<vmem>>, %arg8: memref<8x32xf32, #tpu.memory_space<vmem>>, %arg9: memref<1x1xf32, #tpu.memory_space<vmem>>, %arg10: memref<1x128xf32, #tpu.memory_space<vmem>>) attributes {dimension_semantics = [#tpu.dimension_semantics<parallel>], iteration_bounds = array<i64: 1>, scalar_prefetch = 0 : i64, scratch_operands = 0 : i64, tpu.core_type = #tpu.core_type<tc>, window_params = [{transform_indices = @transform_0, window_bounds = array<i64: 16, 128>}, {transform_indices = @transform_1, window_bounds = array<i64: 4, 128>}, {pipeline_mode = #tpu.pipeline_mode<synchronous>, transform_indices = @transform_2, window_bounds = array<i64: 32, 16>}, {pipeline_mode = #tpu.pipeline_mode<synchronous>, transform_indices = @transform_3, window_bounds = array<i64: 32, 1>}, {pipeline_mode = #tpu.pipeline_mode<synchronous>, transform_indices = @transform_4, window_bounds = array<i64: 32, 32>}, {pipeline_mode = #tpu.pipeline_mode<synchronous>, transform_indices = @transform_5, window_bounds = array<i64: 32, 4>}, {pipeline_mode = #tpu.pipeline_mode<synchronous>, transform_indices = @transform_6, window_bounds = array<i64: 32, 1>}, {pipeline_mode = #tpu.pipeline_mode<synchronous>, transform_indices = @transform_7, window_bounds = array<i64: 8, 32>}, {pipeline_mode = #tpu.pipeline_mode<synchronous>, transform_indices = @transform_8, window_bounds = array<i64: 1, 1>}, {transform_indices = @transform_9, window_bounds = array<i64: 1, 128>}]} {
    %c0 = arith.constant 0 : index
    %c0_0 = arith.constant 0 : index
    %0 = vector.load %arg3[%c0, %c0_0] : memref<32x16xf32, #tpu.memory_space<vmem>>, vector<32x16xf32>
    %c0_1 = arith.constant 0 : index
    %c0_2 = arith.constant 0 : index
    %1 = vector.load %arg1[%c0_1, %c0_2] : memref<16x128xf32, #tpu.memory_space<vmem>>, vector<16x128xf32>
    %cst = arith.constant dense<0.000000e+00> : vector<32x128xf32>
    %2 = tpu.matmul %0, %1, %cst {dimension_numbers = #tpu.dot_dimension_numbers<[1], [0], [0], [1], [0, 0, 1, 1], [], []>} : vector<32x16xf32>, vector<16x128xf32>, vector<32x128xf32> -> vector<32x128xf32>
    %c0_3 = arith.constant 0 : index
    %c0_4 = arith.constant 0 : index
    %3 = vector.load %arg4[%c0_3, %c0_4] : memref<32x1xf32, #tpu.memory_space<vmem>>, vector<32x1xf32>
    %4 = vector.broadcast %3 : vector<32x1xf32> to vector<32x128xf32>
    %5 = arith.addf %2, %4 : vector<32x128xf32>
    %cst_5 = arith.constant 0.000000e+00 : f32
    %6 = vector.broadcast %cst_5 : f32 to vector<32x128xf32>
    %7 = arith.maximumf %5, %6 : vector<32x128xf32>
    %c0_6 = arith.constant 0 : index
    %c0_7 = arith.constant 0 : index
    %8 = vector.load %arg5[%c0_6, %c0_7] : memref<32x32xf32, #tpu.memory_space<vmem>>, vector<32x32xf32>
    %cst_8 = arith.constant dense<0.000000e+00> : vector<32x128xf32>
    %9 = tpu.matmul %8, %7, %cst_8 {dimension_numbers = #tpu.dot_dimension_numbers<[1], [0], [0], [1], [0, 0, 1, 1], [], []>} : vector<32x32xf32>, vector<32x128xf32>, vector<32x128xf32> -> vector<32x128xf32>
    %c0_9 = arith.constant 0 : index
    %c0_10 = arith.constant 0 : index
    %10 = vector.load %arg6[%c0_9, %c0_10] : memref<32x4xf32, #tpu.memory_space<vmem>>, vector<32x4xf32>
    %c0_11 = arith.constant 0 : index
    %c0_12 = arith.constant 0 : index
    %11 = vector.load %arg2[%c0_11, %c0_12] : memref<4x128xf32, #tpu.memory_space<vmem>>, vector<4x128xf32>
    %cst_13 = arith.constant dense<0.000000e+00> : vector<32x128xf32>
    %12 = tpu.matmul %10, %11, %cst_13 {dimension_numbers = #tpu.dot_dimension_numbers<[1], [0], [0], [1], [0, 0, 1, 1], [], []>} : vector<32x4xf32>, vector<4x128xf32>, vector<32x128xf32> -> vector<32x128xf32>
    %13 = arith.addf %9, %12 : vector<32x128xf32>
    %c0_14 = arith.constant 0 : index
    %c0_15 = arith.constant 0 : index
    %14 = vector.load %arg7[%c0_14, %c0_15] : memref<32x1xf32, #tpu.memory_space<vmem>>, vector<32x1xf32>
    %15 = vector.broadcast %14 : vector<32x1xf32> to vector<32x128xf32>
    %16 = arith.addf %13, %15 : vector<32x128xf32>
    %cst_16 = arith.constant 0.000000e+00 : f32
    %17 = vector.broadcast %cst_16 : f32 to vector<32x128xf32>
    %18 = arith.maximumf %16, %17 : vector<32x128xf32>
    %c0_17 = arith.constant 0 : index
    %c0_18 = arith.constant 0 : index
    %19 = vector.load %arg8[%c0_17, %c0_18] : memref<8x32xf32, #tpu.memory_space<vmem>>, vector<8x32xf32>
    %cst_19 = arith.constant dense<0.000000e+00> : vector<8x128xf32>
    %20 = tpu.matmul %19, %18, %cst_19 {dimension_numbers = #tpu.dot_dimension_numbers<[1], [0], [0], [1], [0, 0, 1, 1], [], []>} : vector<8x32xf32>, vector<32x128xf32>, vector<8x128xf32> -> vector<8x128xf32>
    %21 = vector.extract_strided_slice %20 {offsets = [0, 0], sizes = [1, 128], strides = [1, 1]} : vector<8x128xf32> to vector<1x128xf32>
    %c0_20 = arith.constant 0 : index
    %c0_21 = arith.constant 0 : index
    %22 = vector.load %arg9[%c0_20, %c0_21] : memref<1x1xf32, #tpu.memory_space<vmem>>, vector<1x1xf32>
    %23 = vector.broadcast %22 : vector<1x1xf32> to vector<1x128xf32>
    %24 = arith.addf %21, %23 : vector<1x128xf32>
    %c0_22 = arith.constant 0 : index
    %c0_23 = arith.constant 0 : index
    %25 = vector.load %arg10[%c0_22, %c0_23] : memref<1x128xf32, #tpu.memory_space<vmem>>, vector<1x128xf32>
    tpu.vector_store %arg10[%c0_22, %c0_23], %24 {strides = array<i32>} : memref<1x128xf32, #tpu.memory_space<vmem>>, vector<1x128xf32>,
    return
  }
  func.func @transform_0(%arg0: i32) -> (i32, i32) {
    %c0_i32 = arith.constant 0 : i32
    %c0_i32_0 = arith.constant 0 : i32
    return %c0_i32, %arg0 : i32, i32
  }
  func.func @transform_1(%arg0: i32) -> (i32, i32) {
    %c0_i32 = arith.constant 0 : i32
    %c0_i32_0 = arith.constant 0 : i32
    return %c0_i32, %arg0 : i32, i32
  }
  func.func @transform_2(%arg0: i32) -> (i32, i32) {
    %c0_i32 = arith.constant 0 : i32
    %c0_i32_0 = arith.constant 0 : i32
    %c0_i32_1 = arith.constant 0 : i32
    return %c0_i32, %c0_i32_0 : i32, i32
  }
  func.func @transform_3(%arg0: i32) -> (i32, i32) {
    %c0_i32 = arith.constant 0 : i32
    %c0_i32_0 = arith.constant 0 : i32
    %c0_i32_1 = arith.constant 0 : i32
    return %c0_i32, %c0_i32_0 : i32, i32
  }
  func.func @transform_4(%arg0: i32) -> (i32, i32) {
    %c0_i32 = arith.constant 0 : i32
    %c0_i32_0 = arith.constant 0 : i32
    %c0_i32_1 = arith.constant 0 : i32
    return %c0_i32, %c0_i32_0 : i32, i32
  }
  func.func @transform_5(%arg0: i32) -> (i32, i32) {
    %c0_i32 = arith.constant 0 : i32
    %c0_i32_0 = arith.constant 0 : i32
    %c0_i32_1 = arith.constant 0 : i32
    return %c0_i32, %c0_i32_0 : i32, i32
  }
  func.func @transform_6(%arg0: i32) -> (i32, i32) {
    %c0_i32 = arith.constant 0 : i32
    %c0_i32_0 = arith.constant 0 : i32
    %c0_i32_1 = arith.constant 0 : i32
    return %c0_i32, %c0_i32_0 : i32, i32
  }
  func.func @transform_7(%arg0: i32) -> (i32, i32) {
    %c0_i32 = arith.constant 0 : i32
    %c0_i32_0 = arith.constant 0 : i32
    %c0_i32_1 = arith.constant 0 : i32
    return %c0_i32, %c0_i32_0 : i32, i32
  }
  func.func @transform_8(%arg0: i32) -> (i32, i32) {
    %c0_i32 = arith.constant 0 : i32
    %c0_i32_0 = arith.constant 0 : i32
    %c0_i32_1 = arith.constant 0 : i32
    return %c0_i32, %c0_i32_0 : i32, i32
  }
  func.func @transform_9(%arg0: i32) -> (i32, i32) {
    %c0_i32 = arith.constant 0 : i32
    %c0_i32_0 = arith.constant 0 : i32
    return %c0_i32, %arg0 : i32, i32
  }
}

</mosaic_0001>

<llo_original>
// kernel: fcqv_forward.1
$region0: #{fcqv_forward.1}
  #allocation0 [shape = 'u32[]', space=smem, size = 0x4, offset = 0x4, fixed_abs, tag = 'smem constant byte address 0x4 - core index']
  #allocation1 [shape = 'u32[144,128]{1,0:T(1,128)}', space=vmem, size = 0x12000, scoped, tag = 'internal scratch']
  #allocation2 [shape = 'f32[1,1]{1,0:T(1,128)S(1)}', space=vmem, size = 0x200, scoped, tag = 'scoped memory for fcqv_forward.1']
  %s0 = inlined_call_operand.vmem [shape: f32[16,128], index: 0, kind: input, shape index: {}]
  %s1 = inlined_call_operand.vmem [shape: f32[4,128], index: 1, kind: input, shape index: {}]
  %s2 = inlined_call_operand.vmem [shape: f32[32,16], index: 2, kind: input, shape index: {}]
  %s3 = inlined_call_operand.vmem [shape: f32[32,1], index: 3, kind: input, shape index: {}]
  %s4 = inlined_call_operand.vmem [shape: f32[32,32], index: 4, kind: input, shape index: {}]
  %s5 = inlined_call_operand.vmem [shape: f32[32,4], index: 5, kind: input, shape index: {}]
  %s6 = inlined_call_operand.vmem [shape: f32[32,1], index: 6, kind: input, shape index: {}]
  %s7 = inlined_call_operand.vmem [shape: f32[8,32], index: 7, kind: input, shape index: {}]
  %s8 = inlined_call_operand.<no memory space> [shape: f32[1,1], index: 8, kind: input, shape index: {}]
  %s9 = inlined_call_operand.vmem [shape: f32[1,128], index: 9, kind: output, shape index: {}]
  %s10 = sld [smem:[#allocation0]]
  $region46: #{fcqv_forward.1} parent=0
    _
  %s12 = ssub.s32 1, %s10
  %s13 = scalar_select 0, %s12, %s10
  %v14 = vstv %s8
  %15 = vst [vmem:[#allocation2] sm:$0x1] %v14
  // Predicated region
  $region2: #{fcqv_forward.1} parent=0 // pred_check
    _
  $region3: #{fcqv_forward.1} parent=0 // pred_check_branch
    %17 = sbr.rel (0) target = $region5
  $region4: #{fcqv_forward.1} parent=0 // pred_region
    _
  $region5: #{fcqv_forward.1} parent=0 // pred_fallthru
    _
  // Predicated region
  $region6: #{fcqv_forward.1} parent=0 // pred_check
    _
  $region7: #{fcqv_forward.1} parent=0 // pred_check_branch
    %19 = sbr.rel (0) target = $region9
  $region8: #{fcqv_forward.1} parent=0 // pred_region
    _
  $region9: #{fcqv_forward.1} parent=0 // pred_fallthru
    _
  // Predicated region
  $region10: #{fcqv_forward.1} parent=0 // pred_check
    _
  $region11: #{fcqv_forward.1} parent=0 // pred_check_branch
    %21 = sbr.rel (0) target = $region13
  $region12: #{fcqv_forward.1} parent=0 // pred_region
    _
  $region13: #{fcqv_forward.1} parent=0 // pred_fallthru
    _
  // Predicated region
  $region14: #{fcqv_forward.1} parent=0 // pred_check
    _
  $region15: #{fcqv_forward.1} parent=0 // pred_check_branch
    %23 = sbr.rel (0) target = $region17
  $region16: #{fcqv_forward.1} parent=0 // pred_region
    _
  $region17: #{fcqv_forward.1} parent=0 // pred_fallthru
    _
  // Predicated region
  $region18: #{fcqv_forward.1} parent=0 // pred_check
    _
  $region19: #{fcqv_forward.1} parent=0 // pred_check_branch
    %25 = sbr.rel (0) target = $region21
  $region20: #{fcqv_forward.1} parent=0 // pred_region
    _
  $region21: #{fcqv_forward.1} parent=0 // pred_fallthru
    _
  // Predicated region
  $region22: #{fcqv_forward.1} parent=0 // pred_check
    _
  $region23: #{fcqv_forward.1} parent=0 // pred_check_branch
    %27 = sbr.rel (0) target = $region25
  $region24: #{fcqv_forward.1} parent=0 // pred_region
    _
  $region25: #{fcqv_forward.1} parent=0 // pred_fallthru
    _
  // Predicated region
  $region26: #{fcqv_forward.1} parent=0 // pred_check
    _
  $region27: #{fcqv_forward.1} parent=0 // pred_check_branch
    %29 = sbr.rel (0) target = $region29
  $region28: #{fcqv_forward.1} parent=0 // pred_region
    _
  $region29: #{fcqv_forward.1} parent=0 // pred_fallthru
    _
  // Predicated region
  $region30: #{fcqv_forward.1} parent=0 // pred_check
    _
  $region31: #{fcqv_forward.1} parent=0 // pred_check_branch
    %31 = sbr.rel (0) target = $region33
  $region32: #{fcqv_forward.1} parent=0 // pred_region
    _
  $region33: #{fcqv_forward.1} parent=0 // pred_fallthru
    _
  // Predicated region
  $region34: #{fcqv_forward.1} parent=0 // pred_check
    _
  $region35: #{fcqv_forward.1} parent=0 // pred_check_branch
    %33 = sbr.rel (0) target = $region37
  $region36: #{fcqv_forward.1} parent=0 // pred_region
    _
  $region37: #{fcqv_forward.1} parent=0 // pred_fallthru
    _
  %v34 = vld [vmem:[%s2] sm:$0xff]
  %v35 = vld [vmem:[%s2 + $0x8] sm:$0xff]
  %v36 = vld [vmem:[%s2 + $0x10] sm:$0xff]
  %v37 = vld [vmem:[%s2 + $0x18] sm:$0xff]
  %v38 = vld [vmem:[%s0] sm:$0xff]
  %v39 = vld [vmem:[%s0 + $0x8] sm:$0xff]
  %v40 = vld [vmem:[%s3] sm:$0xff]
  %v41 = vld [vmem:[%s3 + $0x8] sm:$0xff]
  %v42 = vld [vmem:[%s3 + $0x10] sm:$0xff]
  %v43 = vld [vmem:[%s3 + $0x18] sm:$0xff]
  %45 = vset.pattern.permute.xlu0 0
  %46 = vperm.xlu0 %45, %v40
  %v47 = vpop.permute.xlu0 %46
  %50 = vset.pattern.permute.xlu0 0
  %51 = vperm.xlu0 %50, %v41
  %v52 = vpop.permute.xlu0 %51
  %55 = vset.pattern.permute.xlu0 0
  %56 = vperm.xlu0 %55, %v42
  %v57 = vpop.permute.xlu0 %56
  %60 = vset.pattern.permute.xlu0 0
  %61 = vperm.xlu0 %60, %v43
  %v62 = vpop.permute.xlu0 %61
  %vm64 = vcmask 130048
  %v66 = vsel %vm64, %v34, 0
  %v69 = vsel %vm64, %v35, 0
  %v72 = vsel %vm64, %v36, 0
  %v75 = vsel %vm64, %v37, 0
  %77 = vmatprep.subr.mxu0 0.0
  %78 = vmatpush1.msra.mxu0 %v38
  %79 = vmatprep.subr.mxu0 0.0
  %80 = vmatpush1.msra.mxu0 %v39
  %81 = vmatprep.subr.mxu0 0.0
  %82 = vmatpush1.msra.mxu0 0.0
  %83 = vmatprep.subr.mxu0 0.0
  %84 = vmatpush1.msra.mxu0 0.0
  %85 = vmatprep.subr.mxu0 0.0
  %86 = vmatpush1.msra.mxu0 0.0
  %87 = vmatprep.subr.mxu0 0.0
  %88 = vmatpush1.msra.mxu0 0.0
  %89 = vmatprep.subr.mxu0 0.0
  %90 = vmatpush1.msra.mxu0 0.0
  %91 = vmatprep.subr.mxu0 0.0
  %92 = vmatpush1.msra.mxu0 0.0
  %93 = vmatprep.subr.mxu0 0.0
  %94 = vmatpush1.msra.mxu0 0.0
  %95 = vmatprep.subr.mxu0 0.0
  %96 = vmatpush1.msra.mxu0 0.0
  %97 = vmatprep.subr.mxu0 0.0
  %98 = vmatpush1.msra.mxu0 0.0
  %99 = vmatprep.subr.mxu0 0.0
  %100 = vmatpush1.msra.mxu0 0.0
  %101 = vmatprep.subr.mxu0 0.0
  %102 = vmatpush1.msra.mxu0 0.0
  %103 = vmatprep.subr.mxu0 0.0
  %104 = vmatpush1.msra.mxu0 0.0
  %105 = vmatprep.subr.mxu0 0.0
  %106 = vmatpush1.msra.mxu0 0.0
  %107 = vmatprep.subr.mxu0 0.0
  %108 = vmatpush1.msra.mxu0 0.0
  %109 = vmatprep.subr.mxu0 0.0
  %110 = vmatpush1.msra.mxu0 0.0
  %111 = vmatprep.subr.mxu0 0.0
  %112 = vmatpush1.msra.mxu0 0.0
  %113 = vmatprep.subr.mxu0 0.0
  %114 = vmatpush1.msra.mxu0 0.0
  %115 = vmatprep.subr.mxu0 0.0
  %116 = vmatpush1.msra.mxu0 0.0
  %117 = vmatprep.subr.mxu0 0.0
  %118 = vmatpush1.msra.mxu0 0.0
  %119 = vmatprep.subr.mxu0 0.0
  %120 = vmatpush1.msra.mxu0 0.0
  %121 = vmatprep.subr.mxu0 0.0
  %122 = vmatpush1.msra.mxu0 0.0
  %123 = vmatprep.subr.mxu0 0.0
  %124 = vmatpush1.msra.mxu0 0.0
  %125 = vmatprep.subr.mxu0 0.0
  %126 = vmatpush1.msra.mxu0 0.0
  %127 = vmatprep.subr.mxu0 0.0
  %128 = vmatpush1.msra.mxu0 0.0
  %129 = vmatprep.subr.mxu0 0.0
  %130 = vmatpush1.msra.mxu0 0.0
  %131 = vmatprep.subr.mxu0 0.0
  %132 = vmatpush1.msra.mxu0 0.0
  %133 = vmatprep.subr.mxu0 0.0
  %134 = vmatpush1.msra.mxu0 0.0
  %135 = vmatprep.subr.mxu0 0.0
  %136 = vmatpush1.msra.mxu0 0.0
  %137 = vmatprep.subr.mxu0 0.0
  %138 = vmatpush1.msra.mxu0 0.0
  %139 = vmatprep.subr.mxu0 0.0
  %140 = vmatpush1.msra.mxu0 0.0
  %141 = vmatprep.mubr.f32.mxu0 0.0
  %142 = vmatmul.mubr.f32.gmra.mrb[0].mxu0 %v66
  %v143 = vpop.f32.mrb[0].mxu0
  %v144 = vadd.f32 %v47, %v143
  %v145 = vpop.f32.mrb[0].mxu0
  %146 = vmatprep.mubr.f32.mxu0 0.0
  %147 = vmatmul.mubr.f32.gmra.mrb[0].mxu0 %v69
  %v148 = vpop.f32.mrb[0].mxu0
  %v149 = vadd.f32 %v52, %v148
  %v150 = vpop.f32.mrb[0].mxu0
  %151 = vmatprep.mubr.f32.mxu0 0.0
  %152 = vmatmul.mubr.f32.gmra.mrb[0].mxu0 %v72
  %v153 = vpop.f32.mrb[0].mxu0
  %v154 = vadd.f32 %v57, %v153
  %v155 = vpop.f32.mrb[0].mxu0
  %156 = vmatprep.mubr.f32.mxu0 0.0
  %157 = vmatmul.mubr.f32.gmra.mrb[0].mxu0 %v75
  %v158 = vpop.f32.mrb[0].mxu0
  %v159 = vadd.f32 %v62, %v158
  %v160 = vpop.f32.mrb[0].mxu0
  %161 = vdwg.mxu0
  %v162 = vmax.f32 %v144, 0.0
  %v163 = vmax.f32 %v149, 0.0
  %v164 = vmax.f32 %v154, 0.0
  %v165 = vmax.f32 %v159, 0.0
  %v166 = vld [vmem:[%s4] sm:$0xff]
  %v167 = vld [vmem:[%s4 + $0x8] sm:$0xff]
  %v168 = vld [vmem:[%s4 + $0x10] sm:$0xff]
  %v169 = vld [vmem:[%s4 + $0x18] sm:$0xff]
  %v170 = vld [vmem:[%s5] sm:$0xff]
  %v171 = vld [vmem:[%s5 + $0x8] sm:$0xff]
  %v172 = vld [vmem:[%s5 + $0x10] sm:$0xff]
  %v173 = vld [vmem:[%s5 + $0x18] sm:$0xff]
  %v174 = vld [vmem:[%s1] sm:$0xf]
  %vm175 = vcmask 31744
  %v177 = vsel %vm175, %v170, 0
  %v180 = vsel %vm175, %v171, 0
  %v183 = vsel %vm175, %v172, 0
  %v186 = vsel %vm175, %v173, 0
  %vm188 = vcmask 1043456
  %v190 = vsel %vm188, %v174, 0
  %192 = vmatprep.subr.mxu0 0.0
  %193 = vmatpush1.msra.mxu0 %v190
  %194 = vmatprep.subr.mxu0 0.0
  %195 = vmatpush1.msra.mxu0 0.0
  %196 = vmatprep.subr.mxu0 0.0
  %197 = vmatpush1.msra.mxu0 0.0
  %198 = vmatprep.subr.mxu0 0.0
  %199 = vmatpush1.msra.mxu0 0.0
  %200 = vmatprep.subr.mxu0 0.0
  %201 = vmatpush1.msra.mxu0 0.0
  %202 = vmatprep.subr.mxu0 0.0
  %203 = vmatpush1.msra.mxu0 0.0
  %204 = vmatprep.subr.mxu0 0.0
  %205 = vmatpush1.msra.mxu0 0.0
  %206 = vmatprep.subr.mxu0 0.0
  %207 = vmatpush1.msra.mxu0 0.0
  %208 = vmatprep.subr.mxu0 0.0
  %209 = vmatpush1.msra.mxu0 0.0
  %210 = vmatprep.subr.mxu0 0.0
  %211 = vmatpush1.msra.mxu0 0.0
  %212 = vmatprep.subr.mxu0 0.0
  %213 = vmatpush1.msra.mxu0 0.0
  %214 = vmatprep.subr.mxu0 0.0
  %215 = vmatpush1.msra.mxu0 0.0
  %216 = vmatprep.subr.mxu0 0.0
  %217 = vmatpush1.msra.mxu0 0.0
  %218 = vmatprep.subr.mxu0 0.0
  %219 = vmatpush1.msra.mxu0 0.0
  %220 = vmatprep.subr.mxu0 0.0
  %221 = vmatpush1.msra.mxu0 0.0
  %222 = vmatprep.subr.mxu0 0.0
  %223 = vmatpush1.msra.mxu0 0.0
  %224 = vmatprep.subr.mxu0 0.0
  %225 = vmatpush1.msra.mxu0 0.0
  %226 = vmatprep.subr.mxu0 0.0
  %227 = vmatpush1.msra.mxu0 0.0
  %228 = vmatprep.subr.mxu0 0.0
  %229 = vmatpush1.msra.mxu0 0.0
  %230 = vmatprep.subr.mxu0 0.0
  %231 = vmatpush1.msra.mxu0 0.0
  %232 = vmatprep.subr.mxu0 0.0
  %233 = vmatpush1.msra.mxu0 0.0
  %234 = vmatprep.subr.mxu0 0.0
  %235 = vmatpush1.msra.mxu0 0.0
  %236 = vmatprep.subr.mxu0 0.0
  %237 = vmatpush1.msra.mxu0 0.0
  %238 = vmatprep.subr.mxu0 0.0
  %239 = vmatpush1.msra.mxu0 0.0
  %240 = vmatprep.subr.mxu0 0.0
  %241 = vmatpush1.msra.mxu0 0.0
  %242 = vmatprep.subr.mxu0 0.0
  %243 = vmatpush1.msra.mxu0 0.0
  %244 = vmatprep.subr.mxu0 0.0
  %245 = vmatpush1.msra.mxu0 0.0
  %246 = vmatprep.subr.mxu0 0.0
  %247 = vmatpush1.msra.mxu0 0.0
  %248 = vmatprep.subr.mxu0 0.0
  %249 = vmatpush1.msra.mxu0 0.0
  %250 = vmatprep.subr.mxu0 0.0
  %251 = vmatpush1.msra.mxu0 0.0
  %252 = vmatprep.subr.mxu0 0.0
  %253 = vmatpush1.msra.mxu0 0.0
  %254 = vmatprep.subr.mxu0 0.0
  %255 = vmatpush1.msra.mxu0 0.0
  %256 = vmatprep.mubr.f32.mxu0 0.0
  %257 = vmatmul.mubr.f32.gmra.mrb[0].mxu0 %v177
  %v258 = vpop.f32.mrb[0].mxu0
  %v259 = vadd.f32 0.0, %v258
  %v260 = vpop.f32.mrb[0].mxu0
  %261 = vmatprep.mubr.f32.mxu0 0.0
  %262 = vmatmul.mubr.f32.gmra.mrb[0].mxu0 %v180
  %v263 = vpop.f32.mrb[0].mxu0
  %v264 = vadd.f32 0.0, %v263
  %v265 = vpop.f32.mrb[0].mxu0
  %266 = vmatprep.mubr.f32.mxu0 0.0
  %267 = vmatmul.mubr.f32.gmra.mrb[0].mxu0 %v183
  %v268 = vpop.f32.mrb[0].mxu0
  %v269 = vadd.f32 0.0, %v268
  %v270 = vpop.f32.mrb[0].mxu0
  %271 = vmatprep.mubr.f32.mxu0 0.0
  %272 = vmatmul.mubr.f32.gmra.mrb[0].mxu0 %v186
  %v273 = vpop.f32.mrb[0].mxu0
  %v274 = vadd.f32 0.0, %v273
  %v275 = vpop.f32.mrb[0].mxu0
  %276 = vdwg.mxu0
  %vm277 = vcmask 261120
  %v279 = vsel %vm277, %v166, 0
  %v282 = vsel %vm277, %v167, 0
  %v285 = vsel %vm277, %v168, 0
  %v288 = vsel %vm277, %v169, 0
  %290 = vmatprep.subr.mxu0 0.0
  %291 = vmatpush1.msra.mxu0 %v162
  %292 = vmatprep.subr.mxu0 0.0
  %293 = vmatpush1.msra.mxu0 %v163
  %294 = vmatprep.subr.mxu0 0.0
  %295 = vmatpush1.msra.mxu0 %v164
  %296 = vmatprep.subr.mxu0 0.0
  %297 = vmatpush1.msra.mxu0 %v165
  %298 = vmatprep.subr.mxu0 0.0
  %299 = vmatpush1.msra.mxu0 0.0
  %300 = vmatprep.subr.mxu0 0.0
  %301 = vmatpush1.msra.mxu0 0.0
  %302 = vmatprep.subr.mxu0 0.0
  %303 = vmatpush1.msra.mxu0 0.0
  %304 = vmatprep.subr.mxu0 0.0
  %305 = vmatpush1.msra.mxu0 0.0
  %306 = vmatprep.subr.mxu0 0.0
  %307 = vmatpush1.msra.mxu0 0.0
  %308 = vmatprep.subr.mxu0 0.0
  %309 = vmatpush1.msra.mxu0 0.0
  %310 = vmatprep.subr.mxu0 0.0
  %311 = vmatpush1.msra.mxu0 0.0
  %312 = vmatprep.subr.mxu0 0.0
  %313 = vmatpush1.msra.mxu0 0.0
  %314 = vmatprep.subr.mxu0 0.0
  %315 = vmatpush1.msra.mxu0 0.0
  %316 = vmatprep.subr.mxu0 0.0
  %317 = vmatpush1.msra.mxu0 0.0
  %318 = vmatprep.subr.mxu0 0.0
  %319 = vmatpush1.msra.mxu0 0.0
  %320 = vmatprep.subr.mxu0 0.0
  %321 = vmatpush1.msra.mxu0 0.0
  %322 = vmatprep.subr.mxu0 0.0
  %323 = vmatpush1.msra.mxu0 0.0
  %324 = vmatprep.subr.mxu0 0.0
  %325 = vmatpush1.msra.mxu0 0.0
  %326 = vmatprep.subr.mxu0 0.0
  %327 = vmatpush1.msra.mxu0 0.0
  %328 = vmatprep.subr.mxu0 0.0
  %329 = vmatpush1.msra.mxu0 0.0
  %330 = vmatprep.subr.mxu0 0.0
  %331 = vmatpush1.msra.mxu0 0.0
  %332 = vmatprep.subr.mxu0 0.0
  %333 = vmatpush1.msra.mxu0 0.0
  %334 = vmatprep.subr.mxu0 0.0
  %335 = vmatpush1.msra.mxu0 0.0
  %336 = vmatprep.subr.mxu0 0.0
  %337 = vmatpush1.msra.mxu0 0.0
  %338 = vmatprep.subr.mxu0 0.0
  %339 = vmatpush1.msra.mxu0 0.0
  %340 = vmatprep.subr.mxu0 0.0
  %341 = vmatpush1.msra.mxu0 0.0
  %342 = vmatprep.subr.mxu0 0.0
  %343 = vmatpush1.msra.mxu0 0.0
  %344 = vmatprep.subr.mxu0 0.0
  %345 = vmatpush1.msra.mxu0 0.0
  %346 = vmatprep.subr.mxu0 0.0
  %347 = vmatpush1.msra.mxu0 0.0
  %348 = vmatprep.subr.mxu0 0.0
  %349 = vmatpush1.msra.mxu0 0.0
  %350 = vmatprep.subr.mxu0 0.0
  %351 = vmatpush1.msra.mxu0 0.0
  %352 = vmatprep.subr.mxu0 0.0
  %353 = vmatpush1.msra.mxu0 0.0
  %354 = vmatprep.mubr.f32.mxu0 0.0
  %355 = vmatmul.mubr.f32.gmra.mrb[0].mxu0 %v279
  %v356 = vpop.f32.mrb[0].mxu0
  %v357 = vadd.f32 %v259, %v356
  %v358 = vpop.f32.mrb[0].mxu0
  %359 = vmatprep.mubr.f32.mxu0 0.0
  %360 = vmatmul.mubr.f32.gmra.mrb[0].mxu0 %v282
  %v361 = vpop.f32.mrb[0].mxu0
  %v362 = vadd.f32 %v264, %v361
  %v363 = vpop.f32.mrb[0].mxu0
  %364 = vmatprep.mubr.f32.mxu0 0.0
  %365 = vmatmul.mubr.f32.gmra.mrb[0].mxu0 %v285
  %v366 = vpop.f32.mrb[0].mxu0
  %v367 = vadd.f32 %v269, %v366
  %v368 = vpop.f32.mrb[0].mxu0
  %369 = vmatprep.mubr.f32.mxu0 0.0
  %370 = vmatmul.mubr.f32.gmra.mrb[0].mxu0 %v288
  %v371 = vpop.f32.mrb[0].mxu0
  %v372 = vadd.f32 %v274, %v371
  %v373 = vpop.f32.mrb[0].mxu0
  %374 = vdwg.mxu0
  %v375 = vld [vmem:[%s6] sm:$0xff]
  %v376 = vld [vmem:[%s6 + $0x8] sm:$0xff]
  %v377 = vld [vmem:[%s6 + $0x10] sm:$0xff]
  %v378 = vld [vmem:[%s6 + $0x18] sm:$0xff]
  %380 = vset.pattern.permute.xlu0 0
  %381 = vperm.xlu0 %380, %v375
  %v382 = vpop.permute.xlu0 %381
  %385 = vset.pattern.permute.xlu0 0
  %386 = vperm.xlu0 %385, %v376
  %v387 = vpop.permute.xlu0 %386
  %390 = vset.pattern.permute.xlu0 0
  %391 = vperm.xlu0 %390, %v377
  %v392 = vpop.permute.xlu0 %391
  %395 = vset.pattern.permute.xlu0 0
  %396 = vperm.xlu0 %395, %v378
  %v397 = vpop.permute.xlu0 %396
  %v399 = vadd.f32 %v357, %v382
  %v400 = vadd.f32 %v362, %v387
  %v401 = vadd.f32 %v367, %v392
  %v402 = vadd.f32 %v372, %v397
  %v403 = vmax.f32 %v399, 0.0
  %v404 = vmax.f32 %v400, 0.0
  %v405 = vmax.f32 %v401, 0.0
  %v406 = vmax.f32 %v402, 0.0
  %v407 = vld [vmem:[%s7] sm:$0xff]
  %v409 = vsel %vm277, %v407, 0
  %411 = vmatprep.subr.mxu0 0.0
  %412 = vmatpush1.msra.mxu0 %v403
  %413 = vmatprep.subr.mxu0 0.0
  %414 = vmatpush1.msra.mxu0 %v404
  %415 = vmatprep.subr.mxu0 0.0
  %416 = vmatpush1.msra.mxu0 %v405
  %417 = vmatprep.subr.mxu0 0.0
  %418 = vmatpush1.msra.mxu0 %v406
  %419 = vmatprep.subr.mxu0 0.0
  %420 = vmatpush1.msra.mxu0 0.0
  %421 = vmatprep.subr.mxu0 0.0
  %422 = vmatpush1.msra.mxu0 0.0
  %423 = vmatprep.subr.mxu0 0.0
  %424 = vmatpush1.msra.mxu0 0.0
  %425 = vmatprep.subr.mxu0 0.0
  %426 = vmatpush1.msra.mxu0 0.0
  %427 = vmatprep.subr.mxu0 0.0
  %428 = vmatpush1.msra.mxu0 0.0
  %429 = vmatprep.subr.mxu0 0.0
  %430 = vmatpush1.msra.mxu0 0.0
  %431 = vmatprep.subr.mxu0 0.0
  %432 = vmatpush1.msra.mxu0 0.0
  %433 = vmatprep.subr.mxu0 0.0
  %434 = vmatpush1.msra.mxu0 0.0
  %435 = vmatprep.subr.mxu0 0.0
  %436 = vmatpush1.msra.mxu0 0.0
  %437 = vmatprep.subr.mxu0 0.0
  %438 = vmatpush1.msra.mxu0 0.0
  %439 = vmatprep.subr.mxu0 0.0
  %440 = vmatpush1.msra.mxu0 0.0
  %441 = vmatprep.subr.mxu0 0.0
  %442 = vmatpush1.msra.mxu0 0.0
  %443 = vmatprep.subr.mxu0 0.0
  %444 = vmatpush1.msra.mxu0 0.0
  %445 = vmatprep.subr.mxu0 0.0
  %446 = vmatpush1.msra.mxu0 0.0
  %447 = vmatprep.subr.mxu0 0.0
  %448 = vmatpush1.msra.mxu0 0.0
  %449 = vmatprep.subr.mxu0 0.0
  %450 = vmatpush1.msra.mxu0 0.0
  %451 = vmatprep.subr.mxu0 0.0
  %452 = vmatpush1.msra.mxu0 0.0
  %453 = vmatprep.subr.mxu0 0.0
  %454 = vmatpush1.msra.mxu0 0.0
  %455 = vmatprep.subr.mxu0 0.0
  %456 = vmatpush1.msra.mxu0 0.0
  %457 = vmatprep.subr.mxu0 0.0
  %458 = vmatpush1.msra.mxu0 0.0
  %459 = vmatprep.subr.mxu0 0.0
  %460 = vmatpush1.msra.mxu0 0.0
  %461 = vmatprep.subr.mxu0 0.0
  %462 = vmatpush1.msra.mxu0 0.0
  %463 = vmatprep.subr.mxu0 0.0
  %464 = vmatpush1.msra.mxu0 0.0
  %465 = vmatprep.subr.mxu0 0.0
  %466 = vmatpush1.msra.mxu0 0.0
  %467 = vmatprep.subr.mxu0 0.0
  %468 = vmatpush1.msra.mxu0 0.0
  %469 = vmatprep.subr.mxu0 0.0
  %470 = vmatpush1.msra.mxu0 0.0
  %471 = vmatprep.subr.mxu0 0.0
  %472 = vmatpush1.msra.mxu0 0.0
  %473 = vmatprep.subr.mxu0 0.0
  %474 = vmatpush1.msra.mxu0 0.0
  %475 = vmatprep.mubr.f32.mxu0 0.0
  %476 = vmatmul.mubr.f32.gmra.mrb[0].mxu0 %v409
  %v477 = vpop.f32.mrb[0].mxu0
  %v478 = vadd.f32 0.0, %v477
  %v479 = vpop.f32.mrb[0].mxu0
  %480 = vdwg.mxu0
  %v481 = vld [vmem:[#allocation2] sm:$0x1]
  %483 = vset.pattern.permute.xlu0 0
  %484 = vperm.xlu0 %483, %v481
  %v485 = vpop.permute.xlu0 %484
  %v487 = vlaneseq
  %v488 = vshrl.u32 %v487, 7
  %v489 = vsub.s32 0, %v488
  %v490 = vrot.slane %v485, %v489
  %v491 = vadd.f32 %v478, %v490
  %492 = vst [vmem:[%s9] sm:$0x1] %v491
  // Predicated region
  $region38: #{fcqv_forward.1} parent=0 // pred_check
    _
  $region39: #{fcqv_forward.1} parent=0 // pred_check_branch
    %494 = sbr.rel (0) target = $region41
  $region40: #{fcqv_forward.1} parent=0 // pred_region
    _
  $region41: #{fcqv_forward.1} parent=0 // pred_fallthru
    _
  // Predicated region
  $region42: #{fcqv_forward.1} parent=0 // pred_check
    _
  $region43: #{fcqv_forward.1} parent=0 // pred_check_branch
    %496 = sbr.rel (0) target = $region45
  $region44: #{fcqv_forward.1} parent=0 // pred_region
    _
  $region45: #{fcqv_forward.1} parent=0 // pred_fallthru
    _

</llo_original>
